<compile_context>
chip_gen: v7x
topology: tpu7x:2x2x1
jax: 0.10.0
libtpu: 0.0.40
codegen_flags: <defaults>
</compile_context>

<pallas_src>
import functools

import jax
import jax.numpy as jnp
from jax.experimental import pallas as pl
from jax.experimental.pallas import tpu as pltpu


# ----------------------------------------------------------------------------
# Pallas kernel
# ----------------------------------------------------------------------------

def _moving_avg_kernel(x_ref, o_ref, *, kernel_size, pad):
    """Stride-1 moving average with edge-replication padding, per (batch, channel) tile.

    x_ref: (bb, L, Cb)
    o_ref: (bb, L + 2*pad - kernel_size + 1, Cb)
    """
    bb, L, Cb = x_ref.shape
    x = x_ref[...].astype(jnp.float32)

    if pad > 0:
        front = jnp.broadcast_to(x[:, 0:1, :], (bb, pad, Cb))
        end = jnp.broadcast_to(x[:, L - 1:L, :], (bb, pad, Cb))
        padded = jnp.concatenate([front, x, end], axis=1)       # (bb, L+2*pad, Cb)
    else:
        padded = x

    l_out = L + 2 * pad - kernel_size + 1
    acc = padded[:, 0:l_out, :]
    for i in range(1, kernel_size):                              # unrolled tap sum (VPU)
        acc = acc + padded[:, i:i + l_out, :]

    o_ref[...] = (acc * (1.0 / kernel_size)).astype(o_ref.dtype)


# ----------------------------------------------------------------------------
# Wrapper
# ----------------------------------------------------------------------------

def moving_avg_pallas(x, kernel_size, stride=1, *, block_b=None, block_c=None):
    """x: (B, L, C) -> (B, (L + 2*pad - kernel_size)//stride + 1, C)."""
    assert x.ndim == 3, x.shape
    B, L, C = x.shape
    pad = (kernel_size - 1) // 2
    l1 = L + 2 * pad - kernel_size + 1        # stride-1 output length
    assert l1 >= 1, "kernel_size too large for sequence length"

    if block_b is None:
        # at least 2 batch tiles when B > 1 so a parallel axis can shard across TCs
        block_b = 1 if B == 1 else min(8, pl.cdiv(B, 2))
    if block_c is None:
        # lane-dense channel tiles when possible; otherwise take the full channel dim
        block_c = min(C, 512) if C % 128 == 0 else C

    grid = (pl.cdiv(B, block_b), pl.cdiv(C, block_c))

    out1 = pl.pallas_call(
        functools.partial(_moving_avg_kernel, kernel_size=kernel_size, pad=pad),
        out_shape=jax.ShapeDtypeStruct((B, l1, C), x.dtype),
        grid=grid,
        in_specs=[pl.BlockSpec((block_b, L, block_c), lambda i, j: (i, 0, j))],
        out_specs=pl.BlockSpec((block_b, l1, block_c), lambda i, j: (i, 0, j)),
        compiler_params=pltpu.CompilerParams(
            dimension_semantics=("parallel", "parallel")),
    )(x)

    if stride == 1:
        return out1
    # AvgPool1d(k, stride)(padded)[t] == stride-1 moving average at position t*stride,
    # so a strided subsample reproduces the reference exactly (slightly wasteful for
    # stride > 1, but the canonical series-decomposition use is stride == 1).
    return out1[:, ::stride, :]


# ----------------------------------------------------------------------------
# Pure-JAX reference (for correctness check)
# ----------------------------------------------------------------------------

def moving_avg_ref(x, kernel_size, stride):
    pad = (kernel_size - 1) // 2
    front = jnp.repeat(x[:, 0:1, :], pad, axis=1)
    end = jnp.repeat(x[:, -1:, :], pad, axis=1)
    xp = jnp.concatenate([front, x, end], axis=1)
    summed = jax.lax.reduce_window(
        xp, 0.0, jax.lax.add, (1, kernel_size, 1), (1, stride, 1), "VALID")
    return summed / kernel_size


# ----------------------------------------------------------------------------
# Main
# ----------------------------------------------------------------------------

if __name__ == "__main__":
    key = jax.random.PRNGKey(0)

    # x in the PyTorch layout (B, seq_len, channels); classic decomposition window.
    B, L, C = 4, 96, 128
    kernel_size, stride = 25, 1
    x = jax.random.normal(key, (B, L, C), jnp.float32)

    out = jax.block_until_ready(moving_avg_pallas(x, kernel_size, stride))
    ref = moving_avg_ref(x, kernel_size, stride)
    assert out.shape == ref.shape == (B, L, C), (out.shape, ref.shape)
    assert bool(jnp.all(jnp.isfinite(out)))
    assert bool(jnp.allclose(out, ref, atol=1e-5, rtol=1e-5))

    # Second config: even kernel + stride > 1 (exercises padding math and the
    # wrapper-side strided subsampling path).
    k2, s2 = 4, 2
    out2 = jax.block_until_ready(moving_avg_pallas(x, k2, s2))
    ref2 = moving_avg_ref(x, k2, s2)
    assert out2.shape == ref2.shape, (out2.shape, ref2.shape)
    assert bool(jnp.allclose(out2, ref2, atol=1e-5, rtol=1e-5))

    print("KERNEL_OK")
</pallas_src>

<mosaic_0001>
module attributes {stable_mosaic.version = 11 : i64} {
  func.func @_moving_avg_kernel(%arg0: i32, %arg1: i32, %arg2: memref<2x96x128xf32, #tpu.memory_space<vmem>>, %arg3: memref<2x96x128xf32, #tpu.memory_space<vmem>>) attributes {dimension_semantics = [#tpu.dimension_semantics<parallel>, #tpu.dimension_semantics<parallel>], iteration_bounds = array<i64: 2, 1>, scalar_prefetch = 0 : i64, scratch_operands = 0 : i64, tpu.core_type = #tpu.core_type<tc>, window_params = [{transform_indices = @transform_0, window_bounds = array<i64: 2, 96, 128>}, {transform_indices = @transform_1, window_bounds = array<i64: 2, 96, 128>}]} {
    %c0 = arith.constant 0 : index
    %c0_0 = arith.constant 0 : index
    %c0_1 = arith.constant 0 : index
    %0 = vector.load %arg2[%c0, %c0_0, %c0_1] : memref<2x96x128xf32, #tpu.memory_space<vmem>>, vector<2x96x128xf32>
    %1 = vector.extract_strided_slice %0 {offsets = [0, 0, 0], sizes = [2, 1, 128], strides = [1, 1, 1]} : vector<2x96x128xf32> to vector<2x1x128xf32>
    %2 = vector.shape_cast %1 : vector<2x1x128xf32> to vector<2x1x128xf32>
    %3 = vector.broadcast %2 : vector<2x1x128xf32> to vector<2x12x128xf32>
    %4 = vector.extract_strided_slice %0 {offsets = [0, 95, 0], sizes = [2, 1, 128], strides = [1, 1, 1]} : vector<2x96x128xf32> to vector<2x1x128xf32>
    %5 = vector.shape_cast %4 : vector<2x1x128xf32> to vector<2x1x128xf32>
    %6 = vector.broadcast %5 : vector<2x1x128xf32> to vector<2x12x128xf32>
    %7 = tpu.concatenate %3, %0, %6 in 1 : vector<2x12x128xf32>, vector<2x96x128xf32>, vector<2x12x128xf32> -> vector<2x120x128xf32>
    %8 = vector.extract_strided_slice %7 {offsets = [0, 0, 0], sizes = [2, 96, 128], strides = [1, 1, 1]} : vector<2x120x128xf32> to vector<2x96x128xf32>
    %9 = vector.extract_strided_slice %7 {offsets = [0, 1, 0], sizes = [2, 96, 128], strides = [1, 1, 1]} : vector<2x120x128xf32> to vector<2x96x128xf32>
    %10 = arith.addf %8, %9 : vector<2x96x128xf32>
    %11 = vector.extract_strided_slice %7 {offsets = [0, 2, 0], sizes = [2, 96, 128], strides = [1, 1, 1]} : vector<2x120x128xf32> to vector<2x96x128xf32>
    %12 = arith.addf %10, %11 : vector<2x96x128xf32>
    %13 = vector.extract_strided_slice %7 {offsets = [0, 3, 0], sizes = [2, 96, 128], strides = [1, 1, 1]} : vector<2x120x128xf32> to vector<2x96x128xf32>
    %14 = arith.addf %12, %13 : vector<2x96x128xf32>
    %15 = vector.extract_strided_slice %7 {offsets = [0, 4, 0], sizes = [2, 96, 128], strides = [1, 1, 1]} : vector<2x120x128xf32> to vector<2x96x128xf32>
    %16 = arith.addf %14, %15 : vector<2x96x128xf32>
    %17 = vector.extract_strided_slice %7 {offsets = [0, 5, 0], sizes = [2, 96, 128], strides = [1, 1, 1]} : vector<2x120x128xf32> to vector<2x96x128xf32>
    %18 = arith.addf %16, %17 : vector<2x96x128xf32>
    %19 = vector.extract_strided_slice %7 {offsets = [0, 6, 0], sizes = [2, 96, 128], strides = [1, 1, 1]} : vector<2x120x128xf32> to vector<2x96x128xf32>
    %20 = arith.addf %18, %19 : vector<2x96x128xf32>
    %21 = vector.extract_strided_slice %7 {offsets = [0, 7, 0], sizes = [2, 96, 128], strides = [1, 1, 1]} : vector<2x120x128xf32> to vector<2x96x128xf32>
    %22 = arith.addf %20, %21 : vector<2x96x128xf32>
    %23 = vector.extract_strided_slice %7 {offsets = [0, 8, 0], sizes = [2, 96, 128], strides = [1, 1, 1]} : vector<2x120x128xf32> to vector<2x96x128xf32>
    %24 = arith.addf %22, %23 : vector<2x96x128xf32>
    %25 = vector.extract_strided_slice %7 {offsets = [0, 9, 0], sizes = [2, 96, 128], strides = [1, 1, 1]} : vector<2x120x128xf32> to vector<2x96x128xf32>
    %26 = arith.addf %24, %25 : vector<2x96x128xf32>
    %27 = vector.extract_strided_slice %7 {offsets = [0, 10, 0], sizes = [2, 96, 128], strides = [1, 1, 1]} : vector<2x120x128xf32> to vector<2x96x128xf32>
    %28 = arith.addf %26, %27 : vector<2x96x128xf32>
    %29 = vector.extract_strided_slice %7 {offsets = [0, 11, 0], sizes = [2, 96, 128], strides = [1, 1, 1]} : vector<2x120x128xf32> to vector<2x96x128xf32>
    %30 = arith.addf %28, %29 : vector<2x96x128xf32>
    %31 = vector.extract_strided_slice %7 {offsets = [0, 12, 0], sizes = [2, 96, 128], strides = [1, 1, 1]} : vector<2x120x128xf32> to vector<2x96x128xf32>
    %32 = arith.addf %30, %31 : vector<2x96x128xf32>
    %33 = vector.extract_strided_slice %7 {offsets = [0, 13, 0], sizes = [2, 96, 128], strides = [1, 1, 1]} : vector<2x120x128xf32> to vector<2x96x128xf32>
    %34 = arith.addf %32, %33 : vector<2x96x128xf32>
    %35 = vector.extract_strided_slice %7 {offsets = [0, 14, 0], sizes = [2, 96, 128], strides = [1, 1, 1]} : vector<2x120x128xf32> to vector<2x96x128xf32>
    %36 = arith.addf %34, %35 : vector<2x96x128xf32>
    %37 = vector.extract_strided_slice %7 {offsets = [0, 15, 0], sizes = [2, 96, 128], strides = [1, 1, 1]} : vector<2x120x128xf32> to vector<2x96x128xf32>
    %38 = arith.addf %36, %37 : vector<2x96x128xf32>
    %39 = vector.extract_strided_slice %7 {offsets = [0, 16, 0], sizes = [2, 96, 128], strides = [1, 1, 1]} : vector<2x120x128xf32> to vector<2x96x128xf32>
    %40 = arith.addf %38, %39 : vector<2x96x128xf32>
    %41 = vector.extract_strided_slice %7 {offsets = [0, 17, 0], sizes = [2, 96, 128], strides = [1, 1, 1]} : vector<2x120x128xf32> to vector<2x96x128xf32>
    %42 = arith.addf %40, %41 : vector<2x96x128xf32>
    %43 = vector.extract_strided_slice %7 {offsets = [0, 18, 0], sizes = [2, 96, 128], strides = [1, 1, 1]} : vector<2x120x128xf32> to vector<2x96x128xf32>
    %44 = arith.addf %42, %43 : vector<2x96x128xf32>
    %45 = vector.extract_strided_slice %7 {offsets = [0, 19, 0], sizes = [2, 96, 128], strides = [1, 1, 1]} : vector<2x120x128xf32> to vector<2x96x128xf32>
    %46 = arith.addf %44, %45 : vector<2x96x128xf32>
    %47 = vector.extract_strided_slice %7 {offsets = [0, 20, 0], sizes = [2, 96, 128], strides = [1, 1, 1]} : vector<2x120x128xf32> to vector<2x96x128xf32>
    %48 = arith.addf %46, %47 : vector<2x96x128xf32>
    %49 = vector.extract_strided_slice %7 {offsets = [0, 21, 0], sizes = [2, 96, 128], strides = [1, 1, 1]} : vector<2x120x128xf32> to vector<2x96x128xf32>
    %50 = arith.addf %48, %49 : vector<2x96x128xf32>
    %51 = vector.extract_strided_slice %7 {offsets = [0, 22, 0], sizes = [2, 96, 128], strides = [1, 1, 1]} : vector<2x120x128xf32> to vector<2x96x128xf32>
    %52 = arith.addf %50, %51 : vector<2x96x128xf32>
    %53 = vector.extract_strided_slice %7 {offsets = [0, 23, 0], sizes = [2, 96, 128], strides = [1, 1, 1]} : vector<2x120x128xf32> to vector<2x96x128xf32>
    %54 = arith.addf %52, %53 : vector<2x96x128xf32>
    %55 = vector.extract_strided_slice %7 {offsets = [0, 24, 0], sizes = [2, 96, 128], strides = [1, 1, 1]} : vector<2x120x128xf32> to vector<2x96x128xf32>
    %56 = arith.addf %54, %55 : vector<2x96x128xf32>
    %cst = arith.constant 4.000000e-02 : f32
    %57 = vector.broadcast %cst : f32 to vector<2x96x128xf32>
    %58 = arith.mulf %56, %57 : vector<2x96x128xf32>
    %c0_2 = arith.constant 0 : index
    %c0_3 = arith.constant 0 : index
    %c0_4 = arith.constant 0 : index
    %59 = vector.load %arg3[%c0_2, %c0_3, %c0_4] : memref<2x96x128xf32, #tpu.memory_space<vmem>>, vector<2x96x128xf32>
    tpu.vector_store %arg3[%c0_2, %c0_3, %c0_4], %58 {strides = array<i32>} : memref<2x96x128xf32, #tpu.memory_space<vmem>>, vector<2x96x128xf32>,
    return
  }
  func.func @transform_0(%arg0: i32, %arg1: i32) -> (i32, i32, i32) {
    %c0_i32 = arith.constant 0 : i32
    %c0_i32_0 = arith.constant 0 : i32
    return %arg0, %c0_i32, %arg1 : i32, i32, i32
  }
  func.func @transform_1(%arg0: i32, %arg1: i32) -> (i32, i32, i32) {
    %c0_i32 = arith.constant 0 : i32
    %c0_i32_0 = arith.constant 0 : i32
    return %arg0, %c0_i32, %arg1 : i32, i32, i32
  }
}

</mosaic_0001>

<llo_original>
// kernel: tpu_custom_call.1
$region0: #{tpu_custom_call.1}
  #allocation0 [shape = 'u32[]', space=smem, size = 0x4, offset = 0x4, fixed_abs, tag = 'smem constant byte address 0x4 - core index']
  #allocation1 [shape = 'u32[144,128]{1,0:T(1,128)}', space=vmem, size = 0x12000, scoped, tag = 'internal scratch']
  %s0 = inlined_call_operand.hbm [shape: f32[4,96,128], index: 0, kind: input, shape index: {}]
  %s1 = inlined_call_operand.hbm [shape: f32[4,96,128], index: 1, kind: output, shape index: {}]
  %s2 = sld [smem:[#allocation0]]
  $region41: #{tpu_custom_call.1} parent=0
    _
  %s4 = ssub.s32 1, %s2
  %s5 = scalar_select 0, %s4, %s2
  $region1: #{tpu_custom_call.1} parent=0
    #allocation2 [shape = 'u8[196608]{0}', space=vmem, size = 0x30000, scoped, tag = 'input window, operand 0']
    #allocation3 [shape = 's32[2]{0}', space=sflag, size = 0x8, scoped, tag = 'scoped memory for tpu_custom_call.1']
    #allocation4 [shape = 's32[2]{0}', space=sflag, size = 0x8, scoped, tag = 'scoped memory for tpu_custom_call.1']
    #allocation5 [shape = 'u8[196608]{0}', space=vmem, size = 0x30000, scoped, tag = 'output window, operand 0']
    %6 = vsyncpa [#allocation3], 0
    %s7 = scalar_lea.sflag [#allocation3], 1
    %8 = vsyncpa %s7, 0
    %9 = vsyncpa [#allocation4], 0
    %s10 = scalar_lea.sflag [#allocation4], 1
    %11 = vsyncpa %s10, 0
    loop: start=0, step=1, limit=4
    $region2: #{tpu_custom_call.1} parent=1 // loop_pre_header
      _
    $region3: #{tpu_custom_call.1} parent=1 // loop_header
      %s13 = sphi 0, %s17
      %p14 = scmp.ge.s32.totalorder %s13, 4
      %s20 = sphi 0, %s32
      %s21 = sphi 0, %s28
      %s22 = sphi 0, %s20
      %s23 = sphi 0, %s21
      %s24 = sphi 0, %s22
      %s25 = sphi 0, %s23
      %s37 = sphi 0, %s39
      %s40 = sphi 0, %s37
      %s41 = sphi 0, %s40
      %s57 = sphi 0, %s41
      %s65 = sphi 0, %s67
      %s68 = sphi 0, %s65
      %s69 = sphi 0, %s68
      %s85 = sphi 0, %s69
    $region4: #{tpu_custom_call.1} parent=1 // loop_header_branch
      %16 = sbr.rel (%p14) target = $region8
    $region5: #{tpu_custom_call.1} parent=1 // loop_body
      %s18 = ssub.s32 %s13, 1
      %s19 = ssub.s32 %s13, 2
      %s26 = sadd.s32 1, %s21
      %p27 = scmp.ge.s32.totalorder %s26, 1
      %s28 = scalar_select %p27, 0, %s26
      %s29 = sadd.s32 1, %s20
      %s30 = scalar_select %p27, %s29, %s20
      %p31 = scmp.ge.s32.totalorder %s30, 2
      %s32 = scalar_select %p31, 0, %s30
      %s33 = ssub.s32 %s20, %s32
      %s34 = ssub.s32 %s21, %s28
      %s35 = sor.u32 %s33, %s34
      %p36 = scmp.eq.s32.totalorder %s35, 0
      %s38 = sadd.s32 %s37, 1
      %s39 = scalar_select %p36, %s37, %s38
      %p42 = pneg %p36
      %p43 = scmp.eq.s32.totalorder %s13, 1
      %p44 = por %p42, %p43
      %p45 = scmp.ne.s32.totalorder %s37, %s40
      %p46 = scmp.eq.s32.totalorder %s13, 0
      %p47 = por %p45, %p46
      %p48 = scmp.ne.s32.totalorder %s37, %s40
      %p49 = scmp.eq.s32.totalorder %s18, 1
      %p50 = por %p48, %p49
      %p51 = scmp.ne.s32.totalorder %s40, %s41
      %p52 = scmp.eq.s32.totalorder %s18, 0
      %p53 = por %p51, %p52
      %p54 = scmp.ne.s32.totalorder %s40, %s41
      %p55 = scmp.eq.s32.totalorder %s19, 1
      %p56 = por %p54, %p55
      %p58 = scmp.ne.s32.totalorder %s41, %s57
      %p59 = scmp.eq.s32.totalorder %s19, 0
      %p60 = por %p58, %p59
      %s61 = ssub.s32 %s20, %s32
      %s62 = ssub.s32 %s21, %s28
      %s63 = sor.u32 %s61, %s62
      %p64 = scmp.eq.s32.totalorder %s63, 0
      %s66 = sadd.s32 %s65, 1
      %s67 = scalar_select %p64, %s65, %s66
      %p70 = pneg %p64
      %p71 = scmp.eq.s32.totalorder %s13, 1
      %p72 = por %p70, %p71
      %p73 = scmp.ne.s32.totalorder %s65, %s68
      %p74 = scmp.eq.s32.totalorder %s13, 0
      %p75 = por %p73, %p74
      %p76 = scmp.ne.s32.totalorder %s65, %s68
      %p77 = scmp.eq.s32.totalorder %s18, 1
      %p78 = por %p76, %p77
      %p79 = scmp.ne.s32.totalorder %s68, %s69
      %p80 = scmp.eq.s32.totalorder %s18, 0
      %p81 = por %p79, %p80
      %p82 = scmp.ne.s32.totalorder %s68, %s69
      %p83 = scmp.eq.s32.totalorder %s19, 1
      %p84 = por %p82, %p83
      %p86 = scmp.ne.s32.totalorder %s69, %s85
      %p87 = scmp.eq.s32.totalorder %s19, 0
      %p88 = por %p86, %p87
      %p89 = scmp.le.s32.totalorder 1, %s13
      %p90 = scmp.lt.s32.totalorder %s13, 3
      %p91 = pnand %p89, %p90
      %p92 = pneg %p91
      // Predicated region
      $region9: #{tpu_custom_call.1} parent=5 // pred_check
        _
      $region10: #{tpu_custom_call.1} parent=5 // pred_check_branch
        %94 = sbr.rel (%p91) target = $region12
      $region11: #{tpu_custom_call.1} parent=5 // pred_region
        %s95 = ssub.s32 %s13, 1
      $region12: #{tpu_custom_call.1} parent=5 // pred_fallthru
        _
      %p96 = scmp.lt.s32.totalorder %s13, 2
      // Predicated region
      $region13: #{tpu_custom_call.1} parent=5 // pred_check
        %p97 = pneg %p96
      $region14: #{tpu_custom_call.1} parent=5 // pred_check_branch
        %99 = sbr.rel (%p97) target = $region16
      $region15: #{tpu_custom_call.1} parent=5 // pred_region
        // Predicated region
        $region17: #{tpu_custom_call.1} parent=15 // pred_check
          %p100 = pneg %p47
        $region18: #{tpu_custom_call.1} parent=15 // pred_check_branch
          %102 = sbr.rel (%p100) target = $region20
        $region19: #{tpu_custom_call.1} parent=15 // pred_region
          %s103 = sand.u32 %s37, 1
          %s104 = scalar_lea.sflag [#allocation3], %s103
          %s105 = sand.u32 %s37, 1
          %s106 = smul.addr %s105, 192
          %s107 = scalar_lea.vmem [#allocation2], %s106
          %s108 = smul.u32 2, %s20
          %s110 = ssub.s32 3072, 3072
          %111 = vsyncadd %s104, %s110
          %s112 = smul.addr %s108, 12
          %s113 = sadd.s32 %s21, %s112
          %s114 = smul.addr %s113, 128
          %s115 = scalar_lea.hbm %s0, %s114
          %s116 = sshll.u32 %s107, 4
          %s117 = int_to_ptr.vmem [resolvable:$true] %s116
          %122 = dma.hbm_to_vmem [thread:$0]  %s115, 3072, %s117, %s104, 128, 128, 8
        $region20: #{tpu_custom_call.1} parent=15 // pred_fallthru
          _
      $region16: #{tpu_custom_call.1} parent=5 // pred_fallthru
        _
      %p123 = scmp.le.s32.totalorder 1, %s13
      %p124 = scmp.lt.s32.totalorder %s13, 3
      %p125 = pnand %p123, %p124
      %p126 = pneg %p125
      // Predicated region
      $region21: #{tpu_custom_call.1} parent=5 // pred_check
        _
      $region22: #{tpu_custom_call.1} parent=5 // pred_check_branch
        %128 = sbr.rel (%p125) target = $region24
      $region23: #{tpu_custom_call.1} parent=5 // pred_region
        %s129 = ssub.s32 %s13, 1
        %s130 = sand.u32 %s40, 1
        %s131 = scalar_lea.sflag [#allocation3], %s130
        %s132 = sand.u32 %s40, 1
        %s133 = smul.addr %s132, 192
        %s134 = scalar_lea.vmem [#allocation2], %s133
        // Predicated region
        $region25: #{tpu_custom_call.1} parent=23 // pred_check
          %p135 = pneg %p53
        $region26: #{tpu_custom_call.1} parent=23 // pred_check_branch
          %137 = sbr.rel (%p135) target = $region28
        $region27: #{tpu_custom_call.1} parent=23 // pred_region
          %138 = dma.done %s131, 3072
        $region28: #{tpu_custom_call.1} parent=23 // pred_fallthru
          _
        %s139 = sand.u32 %s40, 1
        %s140 = scalar_lea.sflag [#allocation3], %s139
        %s141 = sand.u32 %s40, 1
        %s142 = smul.addr %s141, 192
        %s143 = scalar_lea.vmem [#allocation2], %s142
        %p144 = pneg %p53
        %p145 = pneg %p50
        %p146 = pneg %p81
        %p147 = pneg %p78
        %s148 = sand.u32 %s68, 1
        %s149 = scalar_lea.sflag [#allocation4], %s148
        %s150 = sand.u32 %s68, 1
        %s151 = smul.addr %s150, 192
        %s152 = scalar_lea.vmem [#allocation5], %s151
        %s153 = smul.u32 2, %s22
        %s154 = smul.u32 2, %s22
        %v155 = vld [vmem:[%s134] sm:$0xff]
        %v156 = vld [vmem:[%s134 + $0x8] sm:$0xff]
        %v157 = vld [vmem:[%s134 + $0x10] sm:$0xff]
        %v158 = vld [vmem:[%s134 + $0x18] sm:$0xff]
        %v159 = vld [vmem:[%s134 + $0x20] sm:$0xff]
        %v160 = vld [vmem:[%s134 + $0x28] sm:$0xff]
        %v161 = vld [vmem:[%s134 + $0x30] sm:$0xff]
        %v162 = vld [vmem:[%s134 + $0x38] sm:$0xff]
        %v163 = vld [vmem:[%s134 + $0x40] sm:$0xff]
        %v164 = vld [vmem:[%s134 + $0x48] sm:$0xff]
        %v165 = vld [vmem:[%s134 + $0x50] sm:$0xff]
        %v166 = vld [vmem:[%s134 + $0x58] sm:$0xff]
        %v167 = vld [vmem:[%s134 + $0x60] sm:$0xff]
        %v168 = vld [vmem:[%s134 + $0x68] sm:$0xff]
        %v169 = vld [vmem:[%s134 + $0x70] sm:$0xff]
        %v170 = vld [vmem:[%s134 + $0x78] sm:$0xff]
        %v171 = vld [vmem:[%s134 + $0x80] sm:$0xff]
        %v172 = vld [vmem:[%s134 + $0x88] sm:$0xff]
        %v173 = vld [vmem:[%s134 + $0x90] sm:$0xff]
        %v174 = vld [vmem:[%s134 + $0x98] sm:$0xff]
        %v175 = vld [vmem:[%s134 + $0xa0] sm:$0xff]
        %v176 = vld [vmem:[%s134 + $0xa8] sm:$0xff]
        %v177 = vld [vmem:[%s134 + $0xb0] sm:$0xff]
        %v178 = vld [vmem:[%s134 + $0xb8] sm:$0xff]
        %v179 = vlaneseq
        %v180 = vshrl.u32 %v179, 7
        %v181 = vsub.s32 0, %v180
        %v182 = vrot.slane %v155, %v181
        %v183 = vlaneseq
        %v184 = vshrl.u32 %v183, 7
        %v185 = vsub.s32 0, %v184
        %v186 = vrot.slane %v167, %v185
        %v187 = vlaneseq
        %v188 = vshrl.u32 %v187, 7
        %v189 = vsub.s32 7, %v188
        %v190 = vrot.slane %v166, %v189
        %v191 = vlaneseq
        %v192 = vshrl.u32 %v191, 7
        %v193 = vsub.s32 7, %v192
        %v194 = vrot.slane %v178, %v193
        %vm221 = vcmask 1043456
        %v222 = vrot.slane %v155, 4
        %v223 = vrot.slane %v156, 4
        %v224 = vsel %vm221, %v222, %v223
        %v225 = vrot.slane %v157, 4
        %v226 = vsel %vm221, %v223, %v225
        %v227 = vrot.slane %v158, 4
        %v228 = vsel %vm221, %v225, %v227
        %v229 = vrot.slane %v159, 4
        %v230 = vsel %vm221, %v227, %v229
        %v231 = vrot.slane %v160, 4
        %v232 = vsel %vm221, %v229, %v231
        %v233 = vrot.slane %v161, 4
        %v234 = vsel %vm221, %v231, %v233
        %v235 = vrot.slane %v162, 4
        %v236 = vsel %vm221, %v233, %v235
        %v237 = vrot.slane %v163, 4
        %v238 = vsel %vm221, %v235, %v237
        %v239 = vrot.slane %v164, 4
        %v240 = vsel %vm221, %v237, %v239
        %v241 = vrot.slane %v165, 4
        %v242 = vsel %vm221, %v239, %v241
        %v243 = vrot.slane %v166, 4
        %v244 = vsel %vm221, %v241, %v243
        %v245 = vrot.slane %v167, 4
        %v246 = vrot.slane %v168, 4
        %v247 = vsel %vm221, %v245, %v246
        %v248 = vrot.slane %v169, 4
        %v249 = vsel %vm221, %v246, %v248
        %v250 = vrot.slane %v170, 4
        %v251 = vsel %vm221, %v248, %v250
        %v252 = vrot.slane %v171, 4
        %v253 = vsel %vm221, %v250, %v252
        %v254 = vrot.slane %v172, 4
        %v255 = vsel %vm221, %v252, %v254
        %v256 = vrot.slane %v173, 4
        %v257 = vsel %vm221, %v254, %v256
        %v258 = vrot.slane %v174, 4
        %v259 = vsel %vm221, %v256, %v258
        %v260 = vrot.slane %v175, 4
        %v261 = vsel %vm221, %v258, %v260
        %v262 = vrot.slane %v176, 4
        %v263 = vsel %vm221, %v260, %v262
        %v264 = vrot.slane %v177, 4
        %v265 = vsel %vm221, %v262, %v264
        %v266 = vrot.slane %v178, 4
        %v267 = vsel %vm221, %v264, %v266
        %v296 = vsel %vm221, %v182, %v222
        %v297 = vsel %vm221, %v186, %v245
        %v298 = vsel %vm221, %v243, %v190
        %v299 = vsel %vm221, %v266, %v194
        %vm302 = vcmask 1046528
        %v303 = vrot.slane %v182, 1
        %v304 = vrot.slane %v296, 1
        %v305 = vsel %vm302, %v303, %v304
        %v306 = vrot.slane %v224, 1
        %v307 = vsel %vm302, %v304, %v306
        %v308 = vrot.slane %v226, 1
        %v309 = vsel %vm302, %v306, %v308
        %v310 = vrot.slane %v228, 1
        %v311 = vsel %vm302, %v308, %v310
        %v312 = vrot.slane %v230, 1
        %v313 = vsel %vm302, %v310, %v312
        %v314 = vrot.slane %v232, 1
        %v315 = vsel %vm302, %v312, %v314
        %v316 = vrot.slane %v234, 1
        %v317 = vsel %vm302, %v314, %v316
        %v318 = vrot.slane %v236, 1
        %v319 = vsel %vm302, %v316, %v318
        %v320 = vrot.slane %v238, 1
        %v321 = vsel %vm302, %v318, %v320
        %v322 = vrot.slane %v240, 1
        %v323 = vsel %vm302, %v320, %v322
        %v324 = vrot.slane %v242, 1
        %v325 = vsel %vm302, %v322, %v324
        %v326 = vrot.slane %v244, 1
        %v327 = vsel %vm302, %v324, %v326
        %v328 = vrot.slane %v186, 1
        %v329 = vrot.slane %v297, 1
        %v330 = vsel %vm302, %v328, %v329
        %v331 = vrot.slane %v247, 1
        %v332 = vsel %vm302, %v329, %v331
        %v333 = vrot.slane %v249, 1
        %v334 = vsel %vm302, %v331, %v333
        %v335 = vrot.slane %v251, 1
        %v336 = vsel %vm302, %v333, %v335
        %v337 = vrot.slane %v253, 1
        %v338 = vsel %vm302, %v335, %v337
        %v339 = vrot.slane %v255, 1
        %v340 = vsel %vm302, %v337, %v339
        %v341 = vrot.slane %v257, 1
        %v342 = vsel %vm302, %v339, %v341
        %v343 = vrot.slane %v259, 1
        %v344 = vsel %vm302, %v341, %v343
        %v345 = vrot.slane %v261, 1
        %v346 = vsel %vm302, %v343, %v345
        %v347 = vrot.slane %v263, 1
        %v348 = vsel %vm302, %v345, %v347
        %v349 = vrot.slane %v265, 1
        %v350 = vsel %vm302, %v347, %v349
        %v351 = vrot.slane %v267, 1
        %v352 = vsel %vm302, %v349, %v351
        %v377 = vadd.f32 %v182, %v305
        %v378 = vadd.f32 %v296, %v307
        %v379 = vadd.f32 %v224, %v309
        %v380 = vadd.f32 %v226, %v311
        %v381 = vadd.f32 %v228, %v313
        %v382 = vadd.f32 %v230, %v315
        %v383 = vadd.f32 %v232, %v317
        %v384 = vadd.f32 %v234, %v319
        %v385 = vadd.f32 %v236, %v321
        %v386 = vadd.f32 %v238, %v323
        %v387 = vadd.f32 %v240, %v325
        %v388 = vadd.f32 %v242, %v327
        %v389 = vadd.f32 %v186, %v330
        %v390 = vadd.f32 %v297, %v332
        %v391 = vadd.f32 %v247, %v334
        %v392 = vadd.f32 %v249, %v336
        %v393 = vadd.f32 %v251, %v338
        %v394 = vadd.f32 %v253, %v340
        %v395 = vadd.f32 %v255, %v342
        %v396 = vadd.f32 %v257, %v344
        %v397 = vadd.f32 %v259, %v346
        %v398 = vadd.f32 %v261, %v348
        %v399 = vadd.f32 %v263, %v350
        %v400 = vadd.f32 %v265, %v352
        %vm401 = vcmask 1045504
        %v402 = vrot.slane %v182, 2
        %v403 = vrot.slane %v296, 2
        %v404 = vsel %vm401, %v402, %v403
        %v405 = vrot.slane %v224, 2
        %v406 = vsel %vm401, %v403, %v405
        %v407 = vrot.slane %v226, 2
        %v408 = vsel %vm401, %v405, %v407
        %v409 = vrot.slane %v228, 2
        %v410 = vsel %vm401, %v407, %v409
        %v411 = vrot.slane %v230, 2
        %v412 = vsel %vm401, %v409, %v411
        %v413 = vrot.slane %v232, 2
        %v414 = vsel %vm401, %v411, %v413
        %v415 = vrot.slane %v234, 2
        %v416 = vsel %vm401, %v413, %v415
        %v417 = vrot.slane %v236, 2
        %v418 = vsel %vm401, %v415, %v417
        %v419 = vrot.slane %v238, 2
        %v420 = vsel %vm401, %v417, %v419
        %v421 = vrot.slane %v240, 2
        %v422 = vsel %vm401, %v419, %v421
        %v423 = vrot.slane %v242, 2
        %v424 = vsel %vm401, %v421, %v423
        %v425 = vrot.slane %v244, 2
        %v426 = vsel %vm401, %v423, %v425
        %v427 = vrot.slane %v186, 2
        %v428 = vrot.slane %v297, 2
        %v429 = vsel %vm401, %v427, %v428
        %v430 = vrot.slane %v247, 2
        %v431 = vsel %vm401, %v428, %v430
        %v432 = vrot.slane %v249, 2
        %v433 = vsel %vm401, %v430, %v432
        %v434 = vrot.slane %v251, 2
        %v435 = vsel %vm401, %v432, %v434
        %v436 = vrot.slane %v253, 2
        %v437 = vsel %vm401, %v434, %v436
        %v438 = vrot.slane %v255, 2
        %v439 = vsel %vm401, %v436, %v438
        %v440 = vrot.slane %v257, 2
        %v441 = vsel %vm401, %v438, %v440
        %v442 = vrot.slane %v259, 2
        %v443 = vsel %vm401, %v440, %v442
        %v444 = vrot.slane %v261, 2
        %v445 = vsel %vm401, %v442, %v444
        %v446 = vrot.slane %v263, 2
        %v447 = vsel %vm401, %v444, %v446
        %v448 = vrot.slane %v265, 2
        %v449 = vsel %vm401, %v446, %v448
        %v450 = vrot.slane %v267, 2
        %v451 = vsel %vm401, %v448, %v450
        %v476 = vadd.f32 %v377, %v404
        %v477 = vadd.f32 %v378, %v406
        %v478 = vadd.f32 %v379, %v408
        %v479 = vadd.f32 %v380, %v410
        %v480 = vadd.f32 %v381, %v412
        %v481 = vadd.f32 %v382, %v414
        %v482 = vadd.f32 %v383, %v416
        %v483 = vadd.f32 %v384, %v418
        %v484 = vadd.f32 %v385, %v420
        %v485 = vadd.f32 %v386, %v422
        %v486 = vadd.f32 %v387, %v424
        %v487 = vadd.f32 %v388, %v426
        %v488 = vadd.f32 %v389, %v429
        %v489 = vadd.f32 %v390, %v431
        %v490 = vadd.f32 %v391, %v433
        %v491 = vadd.f32 %v392, %v435
        %v492 = vadd.f32 %v393, %v437
        %v493 = vadd.f32 %v394, %v439
        %v494 = vadd.f32 %v395, %v441
        %v495 = vadd.f32 %v396, %v443
        %v496 = vadd.f32 %v397, %v445
        %v497 = vadd.f32 %v398, %v447
        %v498 = vadd.f32 %v399, %v449
        %v499 = vadd.f32 %v400, %v451
        %vm500 = vcmask 1044480
        %v501 = vrot.slane %v182, 3
        %v502 = vrot.slane %v296, 3
        %v503 = vsel %vm500, %v501, %v502
        %v504 = vrot.slane %v224, 3
        %v505 = vsel %vm500, %v502, %v504
        %v506 = vrot.slane %v226, 3
        %v507 = vsel %vm500, %v504, %v506
        %v508 = vrot.slane %v228, 3
        %v509 = vsel %vm500, %v506, %v508
        %v510 = vrot.slane %v230, 3
        %v511 = vsel %vm500, %v508, %v510
        %v512 = vrot.slane %v232, 3
        %v513 = vsel %vm500, %v510, %v512
        %v514 = vrot.slane %v234, 3
        %v515 = vsel %vm500, %v512, %v514
        %v516 = vrot.slane %v236, 3
        %v517 = vsel %vm500, %v514, %v516
        %v518 = vrot.slane %v238, 3
        %v519 = vsel %vm500, %v516, %v518
        %v520 = vrot.slane %v240, 3
        %v521 = vsel %vm500, %v518, %v520
        %v522 = vrot.slane %v242, 3
        %v523 = vsel %vm500, %v520, %v522
        %v524 = vrot.slane %v244, 3
        %v525 = vsel %vm500, %v522, %v524
        %v526 = vrot.slane %v186, 3
        %v527 = vrot.slane %v297, 3
        %v528 = vsel %vm500, %v526, %v527
        %v529 = vrot.slane %v247, 3
        %v530 = vsel %vm500, %v527, %v529
        %v531 = vrot.slane %v249, 3
        %v532 = vsel %vm500, %v529, %v531
        %v533 = vrot.slane %v251, 3
        %v534 = vsel %vm500, %v531, %v533
        %v535 = vrot.slane %v253, 3
        %v536 = vsel %vm500, %v533, %v535
        %v537 = vrot.slane %v255, 3
        %v538 = vsel %vm500, %v535, %v537
        %v539 = vrot.slane %v257, 3
        %v540 = vsel %vm500, %v537, %v539
        %v541 = vrot.slane %v259, 3
        %v542 = vsel %vm500, %v539, %v541
        %v543 = vrot.slane %v261, 3
        %v544 = vsel %vm500, %v541, %v543
        %v545 = vrot.slane %v263, 3
        %v546 = vsel %vm500, %v543, %v545
        %v547 = vrot.slane %v265, 3
        %v548 = vsel %vm500, %v545, %v547
        %v549 = vrot.slane %v267, 3
        %v550 = vsel %vm500, %v547, %v549
        %v575 = vadd.f32 %v476, %v503
        %v576 = vadd.f32 %v477, %v505
        %v577 = vadd.f32 %v478, %v507
        %v578 = vadd.f32 %v479, %v509
        %v579 = vadd.f32 %v480, %v511
        %v580 = vadd.f32 %v481, %v513
        %v581 = vadd.f32 %v482, %v515
        %v582 = vadd.f32 %v483, %v517
        %v583 = vadd.f32 %v484, %v519
        %v584 = vadd.f32 %v485, %v521
        %v585 = vadd.f32 %v486, %v523
        %v586 = vadd.f32 %v487, %v525
        %v587 = vadd.f32 %v488, %v528
        %v588 = vadd.f32 %v489, %v530
        %v589 = vadd.f32 %v490, %v532
        %v590 = vadd.f32 %v491, %v534
        %v591 = vadd.f32 %v492, %v536
        %v592 = vadd.f32 %v493, %v538
        %v593 = vadd.f32 %v494, %v540
        %v594 = vadd.f32 %v495, %v542
        %v595 = vadd.f32 %v496, %v544
        %v596 = vadd.f32 %v497, %v546
        %v597 = vadd.f32 %v498, %v548
        %v598 = vadd.f32 %v499, %v550
        %v599 = vrot.slane %v182, 4
        %v600 = vrot.slane %v296, 4
        %v601 = vsel %vm221, %v599, %v600
        %v602 = vrot.slane %v224, 4
        %v603 = vsel %vm221, %v600, %v602
        %v604 = vrot.slane %v226, 4
        %v605 = vsel %vm221, %v602, %v604
        %v606 = vrot.slane %v228, 4
        %v607 = vsel %vm221, %v604, %v606
        %v608 = vrot.slane %v230, 4
        %v609 = vsel %vm221, %v606, %v608
        %v610 = vrot.slane %v232, 4
        %v611 = vsel %vm221, %v608, %v610
        %v612 = vrot.slane %v234, 4
        %v613 = vsel %vm221, %v610, %v612
        %v614 = vrot.slane %v236, 4
        %v615 = vsel %vm221, %v612, %v614
        %v616 = vrot.slane %v238, 4
        %v617 = vsel %vm221, %v614, %v616
        %v618 = vrot.slane %v240, 4
        %v619 = vsel %vm221, %v616, %v618
        %v620 = vrot.slane %v242, 4
        %v621 = vsel %vm221, %v618, %v620
        %v622 = vrot.slane %v244, 4
        %v623 = vsel %vm221, %v620, %v622
        %v624 = vrot.slane %v186, 4
        %v625 = vrot.slane %v297, 4
        %v626 = vsel %vm221, %v624, %v625
        %v627 = vrot.slane %v247, 4
        %v628 = vsel %vm221, %v625, %v627
        %v629 = vrot.slane %v249, 4
        %v630 = vsel %vm221, %v627, %v629
        %v631 = vrot.slane %v251, 4
        %v632 = vsel %vm221, %v629, %v631
        %v633 = vrot.slane %v253, 4
        %v634 = vsel %vm221, %v631, %v633
        %v635 = vrot.slane %v255, 4
        %v636 = vsel %vm221, %v633, %v635
        %v637 = vrot.slane %v257, 4
        %v638 = vsel %vm221, %v635, %v637
        %v639 = vrot.slane %v259, 4
        %v640 = vsel %vm221, %v637, %v639
        %v641 = vrot.slane %v261, 4
        %v642 = vsel %vm221, %v639, %v641
        %v643 = vrot.slane %v263, 4
        %v644 = vsel %vm221, %v641, %v643
        %v645 = vrot.slane %v265, 4
        %v646 = vsel %vm221, %v643, %v645
        %v647 = vrot.slane %v267, 4
        %v648 = vsel %vm221, %v645, %v647
        %v673 = vadd.f32 %v575, %v601
        %v674 = vadd.f32 %v576, %v603
        %v675 = vadd.f32 %v577, %v605
        %v676 = vadd.f32 %v578, %v607
        %v677 = vadd.f32 %v579, %v609
        %v678 = vadd.f32 %v580, %v611
        %v679 = vadd.f32 %v581, %v613
        %v680 = vadd.f32 %v582, %v615
        %v681 = vadd.f32 %v583, %v617
        %v682 = vadd.f32 %v584, %v619
        %v683 = vadd.f32 %v585, %v621
        %v684 = vadd.f32 %v586, %v623
        %v685 = vadd.f32 %v587, %v626
        %v686 = vadd.f32 %v588, %v628
        %v687 = vadd.f32 %v589, %v630
        %v688 = vadd.f32 %v590, %v632
        %v689 = vadd.f32 %v591, %v634
        %v690 = vadd.f32 %v592, %v636
        %v691 = vadd.f32 %v593, %v638
        %v692 = vadd.f32 %v594, %v640
        %v693 = vadd.f32 %v595, %v642
        %v694 = vadd.f32 %v596, %v644
        %v695 = vadd.f32 %v597, %v646
        %v696 = vadd.f32 %v598, %v648
        %vm697 = vcmask 1042432
        %v698 = vrot.slane %v182, 5
        %v699 = vrot.slane %v296, 5
        %v700 = vsel %vm697, %v698, %v699
        %v701 = vrot.slane %v224, 5
        %v702 = vsel %vm697, %v699, %v701
        %v703 = vrot.slane %v226, 5
        %v704 = vsel %vm697, %v701, %v703
        %v705 = vrot.slane %v228, 5
        %v706 = vsel %vm697, %v703, %v705
        %v707 = vrot.slane %v230, 5
        %v708 = vsel %vm697, %v705, %v707
        %v709 = vrot.slane %v232, 5
        %v710 = vsel %vm697, %v707, %v709
        %v711 = vrot.slane %v234, 5
        %v712 = vsel %vm697, %v709, %v711
        %v713 = vrot.slane %v236, 5
        %v714 = vsel %vm697, %v711, %v713
        %v715 = vrot.slane %v238, 5
        %v716 = vsel %vm697, %v713, %v715
        %v717 = vrot.slane %v240, 5
        %v718 = vsel %vm697, %v715, %v717
        %v719 = vrot.slane %v242, 5
        %v720 = vsel %vm697, %v717, %v719
        %v721 = vrot.slane %v244, 5
        %v722 = vsel %vm697, %v719, %v721
        %v723 = vrot.slane %v186, 5
        %v724 = vrot.slane %v297, 5
        %v725 = vsel %vm697, %v723, %v724
        %v726 = vrot.slane %v247, 5
        %v727 = vsel %vm697, %v724, %v726
        %v728 = vrot.slane %v249, 5
        %v729 = vsel %vm697, %v726, %v728
        %v730 = vrot.slane %v251, 5
        %v731 = vsel %vm697, %v728, %v730
        %v732 = vrot.slane %v253, 5
        %v733 = vsel %vm697, %v730, %v732
        %v734 = vrot.slane %v255, 5
        %v735 = vsel %vm697, %v732, %v734
        %v736 = vrot.slane %v257, 5
        %v737 = vsel %vm697, %v734, %v736
        %v738 = vrot.slane %v259, 5
        %v739 = vsel %vm697, %v736, %v738
        %v740 = vrot.slane %v261, 5
        %v741 = vsel %vm697, %v738, %v740
        %v742 = vrot.slane %v263, 5
        %v743 = vsel %vm697, %v740, %v742
        %v744 = vrot.slane %v265, 5
        %v745 = vsel %vm697, %v742, %v744
        %v746 = vrot.slane %v267, 5
        %v747 = vsel %vm697, %v744, %v746
        %v772 = vadd.f32 %v673, %v700
        %v773 = vadd.f32 %v674, %v702
        %v774 = vadd.f32 %v675, %v704
        %v775 = vadd.f32 %v676, %v706
        %v776 = vadd.f32 %v677, %v708
        %v777 = vadd.f32 %v678, %v710
        %v778 = vadd.f32 %v679, %v712
        %v779 = vadd.f32 %v680, %v714
        %v780 = vadd.f32 %v681, %v716
        %v781 = vadd.f32 %v682, %v718
        %v782 = vadd.f32 %v683, %v720
        %v783 = vadd.f32 %v684, %v722
        %v784 = vadd.f32 %v685, %v725
        %v785 = vadd.f32 %v686, %v727
        %v786 = vadd.f32 %v687, %v729
        %v787 = vadd.f32 %v688, %v731
        %v788 = vadd.f32 %v689, %v733
        %v789 = vadd.f32 %v690, %v735
        %v790 = vadd.f32 %v691, %v737
        %v791 = vadd.f32 %v692, %v739
        %v792 = vadd.f32 %v693, %v741
        %v793 = vadd.f32 %v694, %v743
        %v794 = vadd.f32 %v695, %v745
        %v795 = vadd.f32 %v696, %v747
        %vm796 = vcmask 1041408
        %v797 = vrot.slane %v182, 6
        %v798 = vrot.slane %v296, 6
        %v799 = vsel %vm796, %v797, %v798
        %v800 = vrot.slane %v224, 6
        %v801 = vsel %vm796, %v798, %v800
        %v802 = vrot.slane %v226, 6
        %v803 = vsel %vm796, %v800, %v802
        %v804 = vrot.slane %v228, 6
        %v805 = vsel %vm796, %v802, %v804
        %v806 = vrot.slane %v230, 6
        %v807 = vsel %vm796, %v804, %v806
        %v808 = vrot.slane %v232, 6
        %v809 = vsel %vm796, %v806, %v808
        %v810 = vrot.slane %v234, 6
        %v811 = vsel %vm796, %v808, %v810
        %v812 = vrot.slane %v236, 6
        %v813 = vsel %vm796, %v810, %v812
        %v814 = vrot.slane %v238, 6
        %v815 = vsel %vm796, %v812, %v814
        %v816 = vrot.slane %v240, 6
        %v817 = vsel %vm796, %v814, %v816
        %v818 = vrot.slane %v242, 6
        %v819 = vsel %vm796, %v816, %v818
        %v820 = vrot.slane %v244, 6
        %v821 = vsel %vm796, %v818, %v820
        %v822 = vrot.slane %v186, 6
        %v823 = vrot.slane %v297, 6
        %v824 = vsel %vm796, %v822, %v823
        %v825 = vrot.slane %v247, 6
        %v826 = vsel %vm796, %v823, %v825
        %v827 = vrot.slane %v249, 6
        %v828 = vsel %vm796, %v825, %v827
        %v829 = vrot.slane %v251, 6
        %v830 = vsel %vm796, %v827, %v829
        %v831 = vrot.slane %v253, 6
        %v832 = vsel %vm796, %v829, %v831
        %v833 = vrot.slane %v255, 6
        %v834 = vsel %vm796, %v831, %v833
        %v835 = vrot.slane %v257, 6
        %v836 = vsel %vm796, %v833, %v835
        %v837 = vrot.slane %v259, 6
        %v838 = vsel %vm796, %v835, %v837
        %v839 = vrot.slane %v261, 6
        %v840 = vsel %vm796, %v837, %v839
        %v841 = vrot.slane %v263, 6
        %v842 = vsel %vm796, %v839, %v841
        %v843 = vrot.slane %v265, 6
        %v844 = vsel %vm796, %v841, %v843
        %v845 = vrot.slane %v267, 6
        %v846 = vsel %vm796, %v843, %v845
        %v871 = vadd.f32 %v772, %v799
        %v872 = vadd.f32 %v773, %v801
        %v873 = vadd.f32 %v774, %v803
        %v874 = vadd.f32 %v775, %v805
        %v875 = vadd.f32 %v776, %v807
        %v876 = vadd.f32 %v777, %v809
        %v877 = vadd.f32 %v778, %v811
        %v878 = vadd.f32 %v779, %v813
        %v879 = vadd.f32 %v780, %v815
        %v880 = vadd.f32 %v781, %v817
        %v881 = vadd.f32 %v782, %v819
        %v882 = vadd.f32 %v783, %v821
        %v883 = vadd.f32 %v784, %v824
        %v884 = vadd.f32 %v785, %v826
        %v885 = vadd.f32 %v786, %v828
        %v886 = vadd.f32 %v787, %v830
        %v887 = vadd.f32 %v788, %v832
        %v888 = vadd.f32 %v789, %v834
        %v889 = vadd.f32 %v790, %v836
        %v890 = vadd.f32 %v791, %v838
        %v891 = vadd.f32 %v792, %v840
        %v892 = vadd.f32 %v793, %v842
        %v893 = vadd.f32 %v794, %v844
        %v894 = vadd.f32 %v795, %v846
        %vm895 = vcmask 1040384
        %v896 = vrot.slane %v182, 7
        %v897 = vrot.slane %v296, 7
        %v898 = vsel %vm895, %v896, %v897
        %v899 = vrot.slane %v224, 7
        %v900 = vsel %vm895, %v897, %v899
        %v901 = vrot.slane %v226, 7
        %v902 = vsel %vm895, %v899, %v901
        %v903 = vrot.slane %v228, 7
        %v904 = vsel %vm895, %v901, %v903
        %v905 = vrot.slane %v230, 7
        %v906 = vsel %vm895, %v903, %v905
        %v907 = vrot.slane %v232, 7
        %v908 = vsel %vm895, %v905, %v907
        %v909 = vrot.slane %v234, 7
        %v910 = vsel %vm895, %v907, %v909
        %v911 = vrot.slane %v236, 7
        %v912 = vsel %vm895, %v909, %v911
        %v913 = vrot.slane %v238, 7
        %v914 = vsel %vm895, %v911, %v913
        %v915 = vrot.slane %v240, 7
        %v916 = vsel %vm895, %v913, %v915
        %v917 = vrot.slane %v242, 7
        %v918 = vsel %vm895, %v915, %v917
        %v919 = vrot.slane %v244, 7
        %v920 = vsel %vm895, %v917, %v919
        %v921 = vrot.slane %v186, 7
        %v922 = vrot.slane %v297, 7
        %v923 = vsel %vm895, %v921, %v922
        %v924 = vrot.slane %v247, 7
        %v925 = vsel %vm895, %v922, %v924
        %v926 = vrot.slane %v249, 7
        %v927 = vsel %vm895, %v924, %v926
        %v928 = vrot.slane %v251, 7
        %v929 = vsel %vm895, %v926, %v928
        %v930 = vrot.slane %v253, 7
        %v931 = vsel %vm895, %v928, %v930
        %v932 = vrot.slane %v255, 7
        %v933 = vsel %vm895, %v930, %v932
        %v934 = vrot.slane %v257, 7
        %v935 = vsel %vm895, %v932, %v934
        %v936 = vrot.slane %v259, 7
        %v937 = vsel %vm895, %v934, %v936
        %v938 = vrot.slane %v261, 7
        %v939 = vsel %vm895, %v936, %v938
        %v940 = vrot.slane %v263, 7
        %v941 = vsel %vm895, %v938, %v940
        %v942 = vrot.slane %v265, 7
        %v943 = vsel %vm895, %v940, %v942
        %v944 = vrot.slane %v267, 7
        %v945 = vsel %vm895, %v942, %v944
        %v970 = vadd.f32 %v871, %v898
        %v971 = vadd.f32 %v872, %v900
        %v972 = vadd.f32 %v873, %v902
        %v973 = vadd.f32 %v874, %v904
        %v974 = vadd.f32 %v875, %v906
        %v975 = vadd.f32 %v876, %v908
        %v976 = vadd.f32 %v877, %v910
        %v977 = vadd.f32 %v878, %v912
        %v978 = vadd.f32 %v879, %v914
        %v979 = vadd.f32 %v880, %v916
        %v980 = vadd.f32 %v881, %v918
        %v981 = vadd.f32 %v882, %v920
        %v982 = vadd.f32 %v883, %v923
        %v983 = vadd.f32 %v884, %v925
        %v984 = vadd.f32 %v885, %v927
        %v985 = vadd.f32 %v886, %v929
        %v986 = vadd.f32 %v887, %v931
        %v987 = vadd.f32 %v888, %v933
        %v988 = vadd.f32 %v889, %v935
        %v989 = vadd.f32 %v890, %v937
        %v990 = vadd.f32 %v891, %v939
        %v991 = vadd.f32 %v892, %v941
        %v992 = vadd.f32 %v893, %v943
        %v993 = vadd.f32 %v894, %v945
        %v994 = vadd.f32 %v970, %v296
        %v995 = vadd.f32 %v971, %v224
        %v996 = vadd.f32 %v972, %v226
        %v997 = vadd.f32 %v973, %v228
        %v998 = vadd.f32 %v974, %v230
        %v999 = vadd.f32 %v975, %v232
        %v1000 = vadd.f32 %v976, %v234
        %v1001 = vadd.f32 %v977, %v236
        %v1002 = vadd.f32 %v978, %v238
        %v1003 = vadd.f32 %v979, %v240
        %v1004 = vadd.f32 %v980, %v242
        %v1005 = vadd.f32 %v981, %v244
        %v1006 = vadd.f32 %v982, %v297
        %v1007 = vadd.f32 %v983, %v247
        %v1008 = vadd.f32 %v984, %v249
        %v1009 = vadd.f32 %v985, %v251
        %v1010 = vadd.f32 %v986, %v253
        %v1011 = vadd.f32 %v987, %v255
        %v1012 = vadd.f32 %v988, %v257
        %v1013 = vadd.f32 %v989, %v259
        %v1014 = vadd.f32 %v990, %v261
        %v1015 = vadd.f32 %v991, %v263
        %v1016 = vadd.f32 %v992, %v265
        %v1017 = vadd.f32 %v993, %v267
        %v1020 = vrot.slane %v298, 1
        %v1021 = vsel %vm302, %v326, %v1020
        %v1022 = vrot.slane %v299, 1
        %v1023 = vsel %vm302, %v351, %v1022
        %v1026 = vadd.f32 %v994, %v307
        %v1027 = vadd.f32 %v995, %v309
        %v1028 = vadd.f32 %v996, %v311
        %v1029 = vadd.f32 %v997, %v313
        %v1030 = vadd.f32 %v998, %v315
        %v1031 = vadd.f32 %v999, %v317
        %v1032 = vadd.f32 %v1000, %v319
        %v1033 = vadd.f32 %v1001, %v321
        %v1034 = vadd.f32 %v1002, %v323
        %v1035 = vadd.f32 %v1003, %v325
        %v1036 = vadd.f32 %v1004, %v327
        %v1037 = vadd.f32 %v1005, %v1021
        %v1038 = vadd.f32 %v1006, %v332
        %v1039 = vadd.f32 %v1007, %v334
        %v1040 = vadd.f32 %v1008, %v336
        %v1041 = vadd.f32 %v1009, %v338
        %v1042 = vadd.f32 %v1010, %v340
        %v1043 = vadd.f32 %v1011, %v342
        %v1044 = vadd.f32 %v1012, %v344
        %v1045 = vadd.f32 %v1013, %v346
        %v1046 = vadd.f32 %v1014, %v348
        %v1047 = vadd.f32 %v1015, %v350
        %v1048 = vadd.f32 %v1016, %v352
        %v1049 = vadd.f32 %v1017, %v1023
        %v1050 = vrot.slane %v298, 2
        %v1051 = vsel %vm401, %v425, %v1050
        %v1052 = vrot.slane %v299, 2
        %v1053 = vsel %vm401, %v450, %v1052
        %v1056 = vadd.f32 %v1026, %v406
        %v1057 = vadd.f32 %v1027, %v408
        %v1058 = vadd.f32 %v1028, %v410
        %v1059 = vadd.f32 %v1029, %v412
        %v1060 = vadd.f32 %v1030, %v414
        %v1061 = vadd.f32 %v1031, %v416
        %v1062 = vadd.f32 %v1032, %v418
        %v1063 = vadd.f32 %v1033, %v420
        %v1064 = vadd.f32 %v1034, %v422
        %v1065 = vadd.f32 %v1035, %v424
        %v1066 = vadd.f32 %v1036, %v426
        %v1067 = vadd.f32 %v1037, %v1051
        %v1068 = vadd.f32 %v1038, %v431
        %v1069 = vadd.f32 %v1039, %v433
        %v1070 = vadd.f32 %v1040, %v435
        %v1071 = vadd.f32 %v1041, %v437
        %v1072 = vadd.f32 %v1042, %v439
        %v1073 = vadd.f32 %v1043, %v441
        %v1074 = vadd.f32 %v1044, %v443
        %v1075 = vadd.f32 %v1045, %v445
        %v1076 = vadd.f32 %v1046, %v447
        %v1077 = vadd.f32 %v1047, %v449
        %v1078 = vadd.f32 %v1048, %v451
        %v1079 = vadd.f32 %v1049, %v1053
        %v1080 = vrot.slane %v298, 3
        %v1081 = vsel %vm500, %v524, %v1080
        %v1082 = vrot.slane %v299, 3
        %v1083 = vsel %vm500, %v549, %v1082
        %v1086 = vadd.f32 %v1056, %v505
        %v1087 = vadd.f32 %v1057, %v507
        %v1088 = vadd.f32 %v1058, %v509
        %v1089 = vadd.f32 %v1059, %v511
        %v1090 = vadd.f32 %v1060, %v513
        %v1091 = vadd.f32 %v1061, %v515
        %v1092 = vadd.f32 %v1062, %v517
        %v1093 = vadd.f32 %v1063, %v519
        %v1094 = vadd.f32 %v1064, %v521
        %v1095 = vadd.f32 %v1065, %v523
        %v1096 = vadd.f32 %v1066, %v525
        %v1097 = vadd.f32 %v1067, %v1081
        %v1098 = vadd.f32 %v1068, %v530
        %v1099 = vadd.f32 %v1069, %v532
        %v1100 = vadd.f32 %v1070, %v534
        %v1101 = vadd.f32 %v1071, %v536
        %v1102 = vadd.f32 %v1072, %v538
        %v1103 = vadd.f32 %v1073, %v540
        %v1104 = vadd.f32 %v1074, %v542
        %v1105 = vadd.f32 %v1075, %v544
        %v1106 = vadd.f32 %v1076, %v546
        %v1107 = vadd.f32 %v1077, %v548
        %v1108 = vadd.f32 %v1078, %v550
        %v1109 = vadd.f32 %v1079, %v1083
        %v1110 = vrot.slane %v298, 4
        %v1111 = vsel %vm221, %v622, %v1110
        %v1112 = vrot.slane %v299, 4
        %v1113 = vsel %vm221, %v647, %v1112
        %v1116 = vadd.f32 %v1086, %v603
        %v1117 = vadd.f32 %v1087, %v605
        %v1118 = vadd.f32 %v1088, %v607
        %v1119 = vadd.f32 %v1089, %v609
        %v1120 = vadd.f32 %v1090, %v611
        %v1121 = vadd.f32 %v1091, %v613
        %v1122 = vadd.f32 %v1092, %v615
        %v1123 = vadd.f32 %v1093, %v617
        %v1124 = vadd.f32 %v1094, %v619
        %v1125 = vadd.f32 %v1095, %v621
        %v1126 = vadd.f32 %v1096, %v623
        %v1127 = vadd.f32 %v1097, %v1111
        %v1128 = vadd.f32 %v1098, %v628
        %v1129 = vadd.f32 %v1099, %v630
        %v1130 = vadd.f32 %v1100, %v632
        %v1131 = vadd.f32 %v1101, %v634
        %v1132 = vadd.f32 %v1102, %v636
        %v1133 = vadd.f32 %v1103, %v638
        %v1134 = vadd.f32 %v1104, %v640
        %v1135 = vadd.f32 %v1105, %v642
        %v1136 = vadd.f32 %v1106, %v644
        %v1137 = vadd.f32 %v1107, %v646
        %v1138 = vadd.f32 %v1108, %v648
        %v1139 = vadd.f32 %v1109, %v1113
        %v1140 = vrot.slane %v298, 5
        %v1141 = vsel %vm697, %v721, %v1140
        %v1142 = vrot.slane %v299, 5
        %v1143 = vsel %vm697, %v746, %v1142
        %v1146 = vadd.f32 %v1116, %v702
        %v1147 = vadd.f32 %v1117, %v704
        %v1148 = vadd.f32 %v1118, %v706
        %v1149 = vadd.f32 %v1119, %v708
        %v1150 = vadd.f32 %v1120, %v710
        %v1151 = vadd.f32 %v1121, %v712
        %v1152 = vadd.f32 %v1122, %v714
        %v1153 = vadd.f32 %v1123, %v716
        %v1154 = vadd.f32 %v1124, %v718
        %v1155 = vadd.f32 %v1125, %v720
        %v1156 = vadd.f32 %v1126, %v722
        %v1157 = vadd.f32 %v1127, %v1141
        %v1158 = vadd.f32 %v1128, %v727
        %v1159 = vadd.f32 %v1129, %v729
        %v1160 = vadd.f32 %v1130, %v731
        %v1161 = vadd.f32 %v1131, %v733
        %v1162 = vadd.f32 %v1132, %v735
        %v1163 = vadd.f32 %v1133, %v737
        %v1164 = vadd.f32 %v1134, %v739
        %v1165 = vadd.f32 %v1135, %v741
        %v1166 = vadd.f32 %v1136, %v743
        %v1167 = vadd.f32 %v1137, %v745
        %v1168 = vadd.f32 %v1138, %v747
        %v1169 = vadd.f32 %v1139, %v1143
        %v1170 = vrot.slane %v298, 6
        %v1171 = vsel %vm796, %v820, %v1170
        %v1172 = vrot.slane %v299, 6
        %v1173 = vsel %vm796, %v845, %v1172
        %v1176 = vadd.f32 %v1146, %v801
        %v1177 = vadd.f32 %v1147, %v803
        %v1178 = vadd.f32 %v1148, %v805
        %v1179 = vadd.f32 %v1149, %v807
        %v1180 = vadd.f32 %v1150, %v809
        %v1181 = vadd.f32 %v1151, %v811
        %v1182 = vadd.f32 %v1152, %v813
        %v1183 = vadd.f32 %v1153, %v815
        %v1184 = vadd.f32 %v1154, %v817
        %v1185 = vadd.f32 %v1155, %v819
        %v1186 = vadd.f32 %v1156, %v821
        %v1187 = vadd.f32 %v1157, %v1171
        %v1188 = vadd.f32 %v1158, %v826
        %v1189 = vadd.f32 %v1159, %v828
        %v1190 = vadd.f32 %v1160, %v830
        %v1191 = vadd.f32 %v1161, %v832
        %v1192 = vadd.f32 %v1162, %v834
        %v1193 = vadd.f32 %v1163, %v836
        %v1194 = vadd.f32 %v1164, %v838
        %v1195 = vadd.f32 %v1165, %v840
        %v1196 = vadd.f32 %v1166, %v842
        %v1197 = vadd.f32 %v1167, %v844
        %v1198 = vadd.f32 %v1168, %v846
        %v1199 = vadd.f32 %v1169, %v1173
        %v1200 = vrot.slane %v298, 7
        %v1201 = vsel %vm895, %v919, %v1200
        %v1202 = vrot.slane %v299, 7
        %v1203 = vsel %vm895, %v944, %v1202
        %v1206 = vadd.f32 %v1176, %v900
        %v1207 = vadd.f32 %v1177, %v902
        %v1208 = vadd.f32 %v1178, %v904
        %v1209 = vadd.f32 %v1179, %v906
        %v1210 = vadd.f32 %v1180, %v908
        %v1211 = vadd.f32 %v1181, %v910
        %v1212 = vadd.f32 %v1182, %v912
        %v1213 = vadd.f32 %v1183, %v914
        %v1214 = vadd.f32 %v1184, %v916
        %v1215 = vadd.f32 %v1185, %v918
        %v1216 = vadd.f32 %v1186, %v920
        %v1217 = vadd.f32 %v1187, %v1201
        %v1218 = vadd.f32 %v1188, %v925
        %v1219 = vadd.f32 %v1189, %v927
        %v1220 = vadd.f32 %v1190, %v929
        %v1221 = vadd.f32 %v1191, %v931
        %v1222 = vadd.f32 %v1192, %v933
        %v1223 = vadd.f32 %v1193, %v935
        %v1224 = vadd.f32 %v1194, %v937
        %v1225 = vadd.f32 %v1195, %v939
        %v1226 = vadd.f32 %v1196, %v941
        %v1227 = vadd.f32 %v1197, %v943
        %v1228 = vadd.f32 %v1198, %v945
        %v1229 = vadd.f32 %v1199, %v1203
        %v1230 = vadd.f32 %v1206, %v224
        %v1231 = vadd.f32 %v1207, %v226
        %v1232 = vadd.f32 %v1208, %v228
        %v1233 = vadd.f32 %v1209, %v230
        %v1234 = vadd.f32 %v1210, %v232
        %v1235 = vadd.f32 %v1211, %v234
        %v1236 = vadd.f32 %v1212, %v236
        %v1237 = vadd.f32 %v1213, %v238
        %v1238 = vadd.f32 %v1214, %v240
        %v1239 = vadd.f32 %v1215, %v242
        %v1240 = vadd.f32 %v1216, %v244
        %v1241 = vadd.f32 %v1217, %v298
        %v1242 = vadd.f32 %v1218, %v247
        %v1243 = vadd.f32 %v1219, %v249
        %v1244 = vadd.f32 %v1220, %v251
        %v1245 = vadd.f32 %v1221, %v253
        %v1246 = vadd.f32 %v1222, %v255
        %v1247 = vadd.f32 %v1223, %v257
        %v1248 = vadd.f32 %v1224, %v259
        %v1249 = vadd.f32 %v1225, %v261
        %v1250 = vadd.f32 %v1226, %v263
        %v1251 = vadd.f32 %v1227, %v265
        %v1252 = vadd.f32 %v1228, %v267
        %v1253 = vadd.f32 %v1229, %v299
        %v1254 = vrot.slane %v190, 1
        %v1255 = vsel %vm302, %v1020, %v1254
        %v1256 = vrot.slane %v194, 1
        %v1257 = vsel %vm302, %v1022, %v1256
        %v1260 = vadd.f32 %v1230, %v309
        %v1261 = vadd.f32 %v1231, %v311
        %v1262 = vadd.f32 %v1232, %v313
        %v1263 = vadd.f32 %v1233, %v315
        %v1264 = vadd.f32 %v1234, %v317
        %v1265 = vadd.f32 %v1235, %v319
        %v1266 = vadd.f32 %v1236, %v321
        %v1267 = vadd.f32 %v1237, %v323
        %v1268 = vadd.f32 %v1238, %v325
        %v1269 = vadd.f32 %v1239, %v327
        %v1270 = vadd.f32 %v1240, %v1021
        %v1271 = vadd.f32 %v1241, %v1255
        %v1272 = vadd.f32 %v1242, %v334
        %v1273 = vadd.f32 %v1243, %v336
        %v1274 = vadd.f32 %v1244, %v338
        %v1275 = vadd.f32 %v1245, %v340
        %v1276 = vadd.f32 %v1246, %v342
        %v1277 = vadd.f32 %v1247, %v344
        %v1278 = vadd.f32 %v1248, %v346
        %v1279 = vadd.f32 %v1249, %v348
        %v1280 = vadd.f32 %v1250, %v350
        %v1281 = vadd.f32 %v1251, %v352
        %v1282 = vadd.f32 %v1252, %v1023
        %v1283 = vadd.f32 %v1253, %v1257
        %v1284 = vrot.slane %v190, 2
        %v1285 = vsel %vm401, %v1050, %v1284
        %v1286 = vrot.slane %v194, 2
        %v1287 = vsel %vm401, %v1052, %v1286
        %v1290 = vadd.f32 %v1260, %v408
        %v1291 = vadd.f32 %v1261, %v410
        %v1292 = vadd.f32 %v1262, %v412
        %v1293 = vadd.f32 %v1263, %v414
        %v1294 = vadd.f32 %v1264, %v416
        %v1295 = vadd.f32 %v1265, %v418
        %v1296 = vadd.f32 %v1266, %v420
        %v1297 = vadd.f32 %v1267, %v422
        %v1298 = vadd.f32 %v1268, %v424
        %v1299 = vadd.f32 %v1269, %v426
        %v1300 = vadd.f32 %v1270, %v1051
        %v1301 = vadd.f32 %v1271, %v1285
        %v1302 = vadd.f32 %v1272, %v433
        %v1303 = vadd.f32 %v1273, %v435
        %v1304 = vadd.f32 %v1274, %v437
        %v1305 = vadd.f32 %v1275, %v439
        %v1306 = vadd.f32 %v1276, %v441
        %v1307 = vadd.f32 %v1277, %v443
        %v1308 = vadd.f32 %v1278, %v445
        %v1309 = vadd.f32 %v1279, %v447
        %v1310 = vadd.f32 %v1280, %v449
        %v1311 = vadd.f32 %v1281, %v451
        %v1312 = vadd.f32 %v1282, %v1053
        %v1313 = vadd.f32 %v1283, %v1287
        %v1314 = vrot.slane %v190, 3
        %v1315 = vsel %vm500, %v1080, %v1314
        %v1316 = vrot.slane %v194, 3
        %v1317 = vsel %vm500, %v1082, %v1316
        %v1320 = vadd.f32 %v1290, %v507
        %v1321 = vadd.f32 %v1291, %v509
        %v1322 = vadd.f32 %v1292, %v511
        %v1323 = vadd.f32 %v1293, %v513
        %v1324 = vadd.f32 %v1294, %v515
        %v1325 = vadd.f32 %v1295, %v517
        %v1326 = vadd.f32 %v1296, %v519
        %v1327 = vadd.f32 %v1297, %v521
        %v1328 = vadd.f32 %v1298, %v523
        %v1329 = vadd.f32 %v1299, %v525
        %v1330 = vadd.f32 %v1300, %v1081
        %v1331 = vadd.f32 %v1301, %v1315
        %v1332 = vadd.f32 %v1302, %v532
        %v1333 = vadd.f32 %v1303, %v534
        %v1334 = vadd.f32 %v1304, %v536
        %v1335 = vadd.f32 %v1305, %v538
        %v1336 = vadd.f32 %v1306, %v540
        %v1337 = vadd.f32 %v1307, %v542
        %v1338 = vadd.f32 %v1308, %v544
        %v1339 = vadd.f32 %v1309, %v546
        %v1340 = vadd.f32 %v1310, %v548
        %v1341 = vadd.f32 %v1311, %v550
        %v1342 = vadd.f32 %v1312, %v1083
        %v1343 = vadd.f32 %v1313, %v1317
        %v1344 = vrot.slane %v190, 4
        %v1345 = vsel %vm221, %v1110, %v1344
        %v1346 = vrot.slane %v194, 4
        %v1347 = vsel %vm221, %v1112, %v1346
        %v1350 = vadd.f32 %v1320, %v605
        %v1351 = vadd.f32 %v1321, %v607
        %v1352 = vadd.f32 %v1322, %v609
        %v1353 = vadd.f32 %v1323, %v611
        %v1354 = vadd.f32 %v1324, %v613
        %v1355 = vadd.f32 %v1325, %v615
        %v1356 = vadd.f32 %v1326, %v617
        %v1357 = vadd.f32 %v1327, %v619
        %v1358 = vadd.f32 %v1328, %v621
        %v1359 = vadd.f32 %v1329, %v623
        %v1360 = vadd.f32 %v1330, %v1111
        %v1361 = vadd.f32 %v1331, %v1345
        %v1362 = vadd.f32 %v1332, %v630
        %v1363 = vadd.f32 %v1333, %v632
        %v1364 = vadd.f32 %v1334, %v634
        %v1365 = vadd.f32 %v1335, %v636
        %v1366 = vadd.f32 %v1336, %v638
        %v1367 = vadd.f32 %v1337, %v640
        %v1368 = vadd.f32 %v1338, %v642
        %v1369 = vadd.f32 %v1339, %v644
        %v1370 = vadd.f32 %v1340, %v646
        %v1371 = vadd.f32 %v1341, %v648
        %v1372 = vadd.f32 %v1342, %v1113
        %v1373 = vadd.f32 %v1343, %v1347
        %v1374 = vrot.slane %v190, 5
        %v1375 = vsel %vm697, %v1140, %v1374
        %v1376 = vrot.slane %v194, 5
        %v1377 = vsel %vm697, %v1142, %v1376
        %v1380 = vadd.f32 %v1350, %v704
        %v1381 = vadd.f32 %v1351, %v706
        %v1382 = vadd.f32 %v1352, %v708
        %v1383 = vadd.f32 %v1353, %v710
        %v1384 = vadd.f32 %v1354, %v712
        %v1385 = vadd.f32 %v1355, %v714
        %v1386 = vadd.f32 %v1356, %v716
        %v1387 = vadd.f32 %v1357, %v718
        %v1388 = vadd.f32 %v1358, %v720
        %v1389 = vadd.f32 %v1359, %v722
        %v1390 = vadd.f32 %v1360, %v1141
        %v1391 = vadd.f32 %v1361, %v1375
        %v1392 = vadd.f32 %v1362, %v729
        %v1393 = vadd.f32 %v1363, %v731
        %v1394 = vadd.f32 %v1364, %v733
        %v1395 = vadd.f32 %v1365, %v735
        %v1396 = vadd.f32 %v1366, %v737
        %v1397 = vadd.f32 %v1367, %v739
        %v1398 = vadd.f32 %v1368, %v741
        %v1399 = vadd.f32 %v1369, %v743
        %v1400 = vadd.f32 %v1370, %v745
        %v1401 = vadd.f32 %v1371, %v747
        %v1402 = vadd.f32 %v1372, %v1143
        %v1403 = vadd.f32 %v1373, %v1377
        %v1404 = vrot.slane %v190, 6
        %v1405 = vsel %vm796, %v1170, %v1404
        %v1406 = vrot.slane %v194, 6
        %v1407 = vsel %vm796, %v1172, %v1406
        %v1410 = vadd.f32 %v1380, %v803
        %v1411 = vadd.f32 %v1381, %v805
        %v1412 = vadd.f32 %v1382, %v807
        %v1413 = vadd.f32 %v1383, %v809
        %v1414 = vadd.f32 %v1384, %v811
        %v1415 = vadd.f32 %v1385, %v813
        %v1416 = vadd.f32 %v1386, %v815
        %v1417 = vadd.f32 %v1387, %v817
        %v1418 = vadd.f32 %v1388, %v819
        %v1419 = vadd.f32 %v1389, %v821
        %v1420 = vadd.f32 %v1390, %v1171
        %v1421 = vadd.f32 %v1391, %v1405
        %v1422 = vadd.f32 %v1392, %v828
        %v1423 = vadd.f32 %v1393, %v830
        %v1424 = vadd.f32 %v1394, %v832
        %v1425 = vadd.f32 %v1395, %v834
        %v1426 = vadd.f32 %v1396, %v836
        %v1427 = vadd.f32 %v1397, %v838
        %v1428 = vadd.f32 %v1398, %v840
        %v1429 = vadd.f32 %v1399, %v842
        %v1430 = vadd.f32 %v1400, %v844
        %v1431 = vadd.f32 %v1401, %v846
        %v1432 = vadd.f32 %v1402, %v1173
        %v1433 = vadd.f32 %v1403, %v1407
        %v1434 = vrot.slane %v190, 7
        %v1435 = vsel %vm895, %v1200, %v1434
        %v1436 = vrot.slane %v194, 7
        %v1437 = vsel %vm895, %v1202, %v1436
        %v1440 = vadd.f32 %v1410, %v902
        %v1441 = vadd.f32 %v1411, %v904
        %v1442 = vadd.f32 %v1412, %v906
        %v1443 = vadd.f32 %v1413, %v908
        %v1444 = vadd.f32 %v1414, %v910
        %v1445 = vadd.f32 %v1415, %v912
        %v1446 = vadd.f32 %v1416, %v914
        %v1447 = vadd.f32 %v1417, %v916
        %v1448 = vadd.f32 %v1418, %v918
        %v1449 = vadd.f32 %v1419, %v920
        %v1450 = vadd.f32 %v1420, %v1201
        %v1451 = vadd.f32 %v1421, %v1435
        %v1452 = vadd.f32 %v1422, %v927
        %v1453 = vadd.f32 %v1423, %v929
        %v1454 = vadd.f32 %v1424, %v931
        %v1455 = vadd.f32 %v1425, %v933
        %v1456 = vadd.f32 %v1426, %v935
        %v1457 = vadd.f32 %v1427, %v937
        %v1458 = vadd.f32 %v1428, %v939
        %v1459 = vadd.f32 %v1429, %v941
        %v1460 = vadd.f32 %v1430, %v943
        %v1461 = vadd.f32 %v1431, %v945
        %v1462 = vadd.f32 %v1432, %v1203
        %v1463 = vadd.f32 %v1433, %v1437
        %v1464 = vadd.f32 %v1440, %v226
        %v1465 = vadd.f32 %v1441, %v228
        %v1466 = vadd.f32 %v1442, %v230
        %v1467 = vadd.f32 %v1443, %v232
        %v1468 = vadd.f32 %v1444, %v234
        %v1469 = vadd.f32 %v1445, %v236
        %v1470 = vadd.f32 %v1446, %v238
        %v1471 = vadd.f32 %v1447, %v240
        %v1472 = vadd.f32 %v1448, %v242
        %v1473 = vadd.f32 %v1449, %v244
        %v1474 = vadd.f32 %v1450, %v298
        %v1475 = vadd.f32 %v1451, %v190
        %v1476 = vadd.f32 %v1452, %v249
        %v1477 = vadd.f32 %v1453, %v251
        %v1478 = vadd.f32 %v1454, %v253
        %v1479 = vadd.f32 %v1455, %v255
        %v1480 = vadd.f32 %v1456, %v257
        %v1481 = vadd.f32 %v1457, %v259
        %v1482 = vadd.f32 %v1458, %v261
        %v1483 = vadd.f32 %v1459, %v263
        %v1484 = vadd.f32 %v1460, %v265
        %v1485 = vadd.f32 %v1461, %v267
        %v1486 = vadd.f32 %v1462, %v299
        %v1487 = vadd.f32 %v1463, %v194
        %v1488 = vmul.f32 %v1464, 0.04
        %v1489 = vmul.f32 %v1465, 0.04
        %v1490 = vmul.f32 %v1466, 0.04
        %v1491 = vmul.f32 %v1467, 0.04
        %v1492 = vmul.f32 %v1468, 0.04
        %v1493 = vmul.f32 %v1469, 0.04
        %v1494 = vmul.f32 %v1470, 0.04
        %v1495 = vmul.f32 %v1471, 0.04
        %v1496 = vmul.f32 %v1472, 0.04
        %v1497 = vmul.f32 %v1473, 0.04
        %v1498 = vmul.f32 %v1474, 0.04
        %v1499 = vmul.f32 %v1475, 0.04
        %v1500 = vmul.f32 %v1476, 0.04
        %v1501 = vmul.f32 %v1477, 0.04
        %v1502 = vmul.f32 %v1478, 0.04
        %v1503 = vmul.f32 %v1479, 0.04
        %v1504 = vmul.f32 %v1480, 0.04
        %v1505 = vmul.f32 %v1481, 0.04
        %v1506 = vmul.f32 %v1482, 0.04
        %v1507 = vmul.f32 %v1483, 0.04
        %v1508 = vmul.f32 %v1484, 0.04
        %v1509 = vmul.f32 %v1485, 0.04
        %v1510 = vmul.f32 %v1486, 0.04
        %v1511 = vmul.f32 %v1487, 0.04
        %1512 = vst [vmem:[%s152] sm:$0xff] %v1488
        %1513 = vst [vmem:[%s152 + $0x8] sm:$0xff] %v1489
        %1514 = vst [vmem:[%s152 + $0x10] sm:$0xff] %v1490
        %1515 = vst [vmem:[%s152 + $0x18] sm:$0xff] %v1491
        %1516 = vst [vmem:[%s152 + $0x20] sm:$0xff] %v1492
        %1517 = vst [vmem:[%s152 + $0x28] sm:$0xff] %v1493
        %1518 = vst [vmem:[%s152 + $0x30] sm:$0xff] %v1494
        %1519 = vst [vmem:[%s152 + $0x38] sm:$0xff] %v1495
        %1520 = vst [vmem:[%s152 + $0x40] sm:$0xff] %v1496
        %1521 = vst [vmem:[%s152 + $0x48] sm:$0xff] %v1497
        %1522 = vst [vmem:[%s152 + $0x50] sm:$0xff] %v1498
        %1523 = vst [vmem:[%s152 + $0x58] sm:$0xff] %v1499
        %1524 = vst [vmem:[%s152 + $0x60] sm:$0xff] %v1500
        %1525 = vst [vmem:[%s152 + $0x68] sm:$0xff] %v1501
        %1526 = vst [vmem:[%s152 + $0x70] sm:$0xff] %v1502
        %1527 = vst [vmem:[%s152 + $0x78] sm:$0xff] %v1503
        %1528 = vst [vmem:[%s152 + $0x80] sm:$0xff] %v1504
        %1529 = vst [vmem:[%s152 + $0x88] sm:$0xff] %v1505
        %1530 = vst [vmem:[%s152 + $0x90] sm:$0xff] %v1506
        %1531 = vst [vmem:[%s152 + $0x98] sm:$0xff] %v1507
        %1532 = vst [vmem:[%s152 + $0xa0] sm:$0xff] %v1508
        %1533 = vst [vmem:[%s152 + $0xa8] sm:$0xff] %v1509
        %1534 = vst [vmem:[%s152 + $0xb0] sm:$0xff] %v1510
        %1535 = vst [vmem:[%s152 + $0xb8] sm:$0xff] %v1511
        %s1536 = sand.u32 %s68, 1
        %s1537 = scalar_lea.sflag [#allocation4], %s1536
        %s1538 = sand.u32 %s68, 1
        %s1539 = smul.addr %s1538, 192
        %s1540 = scalar_lea.vmem [#allocation5], %s1539
        // Predicated region
        $region29: #{tpu_custom_call.1} parent=23 // pred_check
          %p1541 = pneg %p78
        $region30: #{tpu_custom_call.1} parent=23 // pred_check_branch
          %1543 = sbr.rel (%p1541) target = $region32
        $region31: #{tpu_custom_call.1} parent=23 // pred_region
          %s1544 = smul.u32 2, %s22
          %s1546 = ssub.s32 3072, 3072
          %1547 = vsyncadd %s1537, %s1546
          %s1548 = smul.addr %s1544, 12
          %s1549 = sadd.s32 %s23, %s1548
          %s1550 = smul.addr %s1549, 128
          %s1551 = scalar_lea.hbm %s1, %s1550
          %s1552 = sshll.u32 %s1540, 4
          %s1553 = int_to_ptr.vmem [resolvable:$true] %s1552
          %1558 = dma.vmem_to_hbm [thread:$0]  %s1553, 3072, %s1551, %s1537, 128, 128, 8
        $region32: #{tpu_custom_call.1} parent=23 // pred_fallthru
          _
      $region24: #{tpu_custom_call.1} parent=5 // pred_fallthru
        _
      %p1559 = scmp.le.s32.totalorder 2, %s13
      // Predicated region
      $region33: #{tpu_custom_call.1} parent=5 // pred_check
        %p1560 = pneg %p1559
      $region34: #{tpu_custom_call.1} parent=5 // pred_check_branch
        %1562 = sbr.rel (%p1560) target = $region36
      $region35: #{tpu_custom_call.1} parent=5 // pred_region
        %s1563 = ssub.s32 %s13, 2
        // Predicated region
        $region37: #{tpu_custom_call.1} parent=35 // pred_check
          %p1564 = pneg %p84
        $region38: #{tpu_custom_call.1} parent=35 // pred_check_branch
          %1566 = sbr.rel (%p1564) target = $region40
        $region39: #{tpu_custom_call.1} parent=35 // pred_region
          %s1567 = sand.u32 %s69, 1
          %s1568 = scalar_lea.sflag [#allocation4], %s1567
          %s1569 = sand.u32 %s69, 1
          %s1570 = smul.addr %s1569, 192
          %s1571 = scalar_lea.vmem [#allocation5], %s1570
          %1572 = dma.done %s1568, 3072
        $region40: #{tpu_custom_call.1} parent=35 // pred_fallthru
          _
      $region36: #{tpu_custom_call.1} parent=5 // pred_fallthru
        _
    $region6: #{tpu_custom_call.1} parent=1 // loop_footer
      %s17 = sadd.s32 1, %s13
    $region7: #{tpu_custom_call.1} parent=1 // loop_footer_branch
      %12 = sbr.rel target = $region3
    $region8: #{tpu_custom_call.1} parent=1 // loop_exit
      _
    %1573 = vsyncpa [#allocation3], 1
    %s1574 = scalar_lea.sflag [#allocation3], 1
    %1575 = vsyncpa %s1574, 1
    %1576 = vsyncpa [#allocation4], 1
    %s1577 = scalar_lea.sflag [#allocation4], 1
    %1578 = vsyncpa %s1577, 1

</llo_original>
